<compile_context>
chip_gen: v5e
topology: v5e:2x2
jax: 0.10.0
libtpu: 0.0.40
codegen_flags: <defaults>
</compile_context>

<pallas_src>
import math

import jax
import jax.numpy as jnp
from jax.experimental import pallas as pl
from jax.experimental.pallas import tpu as pltpu

HEAD_DIM = 64


def attention_kernel(x_ref, kv_ref, wqt_ref, wkt_ref, wvt_ref, wot_ref, bo_ref, o_ref):
    # x_ref  : (Bt, Sq, C)     hidden-state tile
    # kv_ref : (Bt, Skv, Ep)   encoder tile (in-features zero-padded to Ep)
    # wqt_ref: (C, C)          to_q.T with 1/sqrt(head_dim) folded in
    # wkt_ref: (Ep, C)         to_k.T (rows zero-padded E -> Ep)
    # wvt_ref: (Ep, C)         to_v.T (rows zero-padded E -> Ep)
    # wot_ref: (C, C)          to_out.T
    # bo_ref : (1, C)          to_out bias
    # o_ref  : (Bt, Sq, C)
    Bt, Sq, C = x_ref.shape
    Skv = kv_ref.shape[1]
    Ep = kv_ref.shape[2]
    H = C // HEAD_DIM
    D = HEAD_DIM

    # Flatten batch into the M dimension so the MXU sees Bt*Sq / Bt*Skv rows.
    x2 = x_ref[...].reshape(Bt * Sq, C)
    kv2 = kv_ref[...].reshape(Bt * Skv, Ep)

    # Projections: y = x @ W.T is done as x @ (pre-transposed W); operands stay
    # in the input dtype, accumulation in f32 on the MXU. Scale is in wqt.
    q = jnp.dot(x2, wqt_ref[...], preferred_element_type=jnp.float32)   # (Bt*Sq, C)
    k = jnp.dot(kv2, wkt_ref[...], preferred_element_type=jnp.float32)  # (Bt*Skv, C)
    v = jnp.dot(kv2, wvt_ref[...], preferred_element_type=jnp.float32)  # (Bt*Skv, C)

    wot = wot_ref[...]

    # Per-head attention (static loop, H = C // 64 is small). Each head's
    # output is folded straight through the matching 64-row slab of the output
    # weight, so no lane-axis concatenate or masked stores are needed.
    acc = jnp.zeros((Bt * Sq, C), dtype=jnp.float32)
    for h in range(H):
        lo, hi = h * D, (h + 1) * D
        qh = q[:, lo:hi].reshape(Bt, Sq, D)
        kh = k[:, lo:hi].reshape(Bt, Skv, D)
        vh = v[:, lo:hi].reshape(Bt, Skv, D)

        # Batched score matmul (single leading batch dim), no k^T materialized.
        s = jnp.einsum("bqd,bkd->bqk", qh, kh,
                       preferred_element_type=jnp.float32)               # (Bt, Sq, Skv)
        m = jnp.max(s, axis=-1, keepdims=True)
        p = jnp.exp(s - m)
        denom = jnp.sum(p, axis=-1, keepdims=True)
        p = p * pl.reciprocal(denom, approx=False)                       # EUP, not VPU divide

        oh = jnp.einsum("bqk,bkd->bqd", p.astype(vh.dtype), vh,
                        preferred_element_type=jnp.float32)              # (Bt, Sq, D)

        acc = acc + jnp.dot(oh.reshape(Bt * Sq, D).astype(wot.dtype),
                            wot[lo:hi, :],
                            preferred_element_type=jnp.float32)

    out = acc + bo_ref[...].astype(jnp.float32)
    o_ref[...] = out.reshape(Bt, Sq, C).astype(o_ref.dtype)


def _round_up(x, m):
    return ((x + m - 1) // m) * m


def _pick_batch_tile(B, max_bt=8):
    bt = min(B, max_bt)
    while B % bt != 0:
        bt -= 1
    return bt


def attention_forward(hidden_states, encoder_hidden_states, wq, wk, wv, wo, bo,
                      *, max_batch_tile=8):
    """hidden_states: (B, Sq, C); encoder_hidden_states: (B, Skv, E).
    Weights follow PyTorch nn.Linear convention: shape (out_features, in_features)."""
    B, Sq, C = hidden_states.shape
    Skv, E = encoder_hidden_states.shape[1], encoder_hidden_states.shape[2]
    assert C % HEAD_DIM == 0, "channels must be a multiple of head_dim=64"

    # Free layout plumbing in the wrapper: pre-transpose weights, fold the
    # 1/sqrt(head_dim) scale into to_q, and zero-pad the encoder contraction
    # dim to a lane-aligned multiple of 128 (zero rows/cols -> identical math).
    scale = 1.0 / math.sqrt(HEAD_DIM)
    wqt = (wq * scale).T.astype(wq.dtype)   # (C, C)
    wkt = wk.T                              # (E, C)
    wvt = wv.T                              # (E, C)
    wot = wo.T                              # (C, C)
    bo2 = bo.reshape(1, C)

    Ep = _round_up(E, 128)
    enc = encoder_hidden_states
    if Ep != E:
        enc = jnp.pad(enc, ((0, 0), (0, 0), (0, Ep - E)))
        wkt = jnp.pad(wkt, ((0, Ep - E), (0, 0)))
        wvt = jnp.pad(wvt, ((0, Ep - E), (0, 0)))

    Bt = _pick_batch_tile(B, max_batch_tile)
    grid = (B // Bt,)

    return pl.pallas_call(
        attention_kernel,
        out_shape=jax.ShapeDtypeStruct((B, Sq, C), hidden_states.dtype),
        grid_spec=pltpu.PrefetchScalarGridSpec(
            num_scalar_prefetch=0,
            grid=grid,
            in_specs=[
                pl.BlockSpec((Bt, Sq, C), lambda b: (b, 0, 0)),    # hidden_states
                pl.BlockSpec((Bt, Skv, Ep), lambda b: (b, 0, 0)),  # encoder states (padded)
                pl.BlockSpec((C, C), lambda b: (0, 0)),            # to_q.T * scale
                pl.BlockSpec((Ep, C), lambda b: (0, 0)),           # to_k.T (padded)
                pl.BlockSpec((Ep, C), lambda b: (0, 0)),           # to_v.T (padded)
                pl.BlockSpec((C, C), lambda b: (0, 0)),            # to_out.T
                pl.BlockSpec((1, C), lambda b: (0, 0)),            # to_out bias
            ],
            out_specs=pl.BlockSpec((Bt, Sq, C), lambda b: (b, 0, 0)),
        ),
        compiler_params=pltpu.CompilerParams(
            dimension_semantics=("parallel",),
            vmem_limit_bytes=32 * 1024 * 1024,
        ),
    )(hidden_states, enc, wqt, wkt, wvt, wot, bo2)


def attention_reference(x, enc, wq, wk, wv, wo, bo):
    """Pure-JAX reference mirroring the PyTorch forward."""
    B, Sq, C = x.shape
    Skv = enc.shape[1]
    H = C // HEAD_DIM
    q = (x @ wq.T).reshape(B, Sq, H, HEAD_DIM)
    k = (enc @ wk.T).reshape(B, Skv, H, HEAD_DIM)
    v = (enc @ wv.T).reshape(B, Skv, H, HEAD_DIM)
    s = jnp.einsum("bqhd,bkhd->bhqk", q, k) / math.sqrt(HEAD_DIM)
    p = jax.nn.softmax(s, axis=-1)
    o = jnp.einsum("bhqk,bkhd->bqhd", p, v).reshape(B, Sq, C)
    return o @ wo.T + bo


if __name__ == "__main__":
    # Small shapes consistent with the module: channels must be a multiple of
    # head_dim=64 -> C=128 (2 heads), encoder_hidden_states_dim=96.
    B, Sq, Skv, C, E = 2, 8, 8, 128, 96

    key = jax.random.PRNGKey(0)
    ks = jax.random.split(key, 7)
    x = jax.random.normal(ks[0], (B, Sq, C), dtype=jnp.float32)
    enc = jax.random.normal(ks[1], (B, Skv, E), dtype=jnp.float32)

    # Deterministic parameter init (PyTorch Linear-style uniform bounds).
    def linear_init(k, out_dim, in_dim):
        bound = 1.0 / (in_dim ** 0.5)
        return jax.random.uniform(k, (out_dim, in_dim), jnp.float32, -bound, bound)

    wq = linear_init(ks[2], C, C)
    wk = linear_init(ks[3], C, E)
    wv = linear_init(ks[4], C, E)
    wo = linear_init(ks[5], C, C)
    bo = jax.random.uniform(ks[6], (C,), jnp.float32, -1.0 / (C ** 0.5), 1.0 / (C ** 0.5))

    out = attention_forward(x, enc, wq, wk, wv, wo, bo)
    out = jax.block_until_ready(out)

    ref = attention_reference(x, enc, wq, wk, wv, wo, bo)
    assert out.shape == (B, Sq, C)
    assert jnp.allclose(out, ref, atol=2e-4, rtol=2e-4)

    print("KERNEL_OK")
</pallas_src>

<mosaic_0001>
module attributes {stable_mosaic.version = 11 : i64} {
  func.func @attention_kernel(%arg0: i32, %arg1: memref<2x8x128xf32, #tpu.memory_space<vmem>>, %arg2: memref<2x8x128xf32, #tpu.memory_space<vmem>>, %arg3: memref<128x128xf32, #tpu.memory_space<vmem>>, %arg4: memref<128x128xf32, #tpu.memory_space<vmem>>, %arg5: memref<128x128xf32, #tpu.memory_space<vmem>>, %arg6: memref<128x128xf32, #tpu.memory_space<vmem>>, %arg7: memref<1x128xf32, #tpu.memory_space<vmem>>, %arg8: memref<2x8x128xf32, #tpu.memory_space<vmem>>) attributes {dimension_semantics = [#tpu.dimension_semantics<parallel>], iteration_bounds = array<i64: 1>, scalar_prefetch = 0 : i64, scratch_operands = 0 : i64, tpu.core_type = #tpu.core_type<tc>, window_params = [{transform_indices = @transform_0, window_bounds = array<i64: 2, 8, 128>}, {transform_indices = @transform_1, window_bounds = array<i64: 2, 8, 128>}, {pipeline_mode = #tpu.pipeline_mode<synchronous>, transform_indices = @transform_2, window_bounds = array<i64: 128, 128>}, {pipeline_mode = #tpu.pipeline_mode<synchronous>, transform_indices = @transform_3, window_bounds = array<i64: 128, 128>}, {pipeline_mode = #tpu.pipeline_mode<synchronous>, transform_indices = @transform_4, window_bounds = array<i64: 128, 128>}, {pipeline_mode = #tpu.pipeline_mode<synchronous>, transform_indices = @transform_5, window_bounds = array<i64: 128, 128>}, {pipeline_mode = #tpu.pipeline_mode<synchronous>, transform_indices = @transform_6, window_bounds = array<i64: 1, 128>}, {transform_indices = @transform_7, window_bounds = array<i64: 2, 8, 128>}]} {
    %c0 = arith.constant 0 : index
    %c0_0 = arith.constant 0 : index
    %c0_1 = arith.constant 0 : index
    %0 = vector.load %arg1[%c0, %c0_0, %c0_1] : memref<2x8x128xf32, #tpu.memory_space<vmem>>, vector<2x8x128xf32>
    %1 = vector.shape_cast %0 : vector<2x8x128xf32> to vector<16x128xf32>
    %c0_2 = arith.constant 0 : index
    %c0_3 = arith.constant 0 : index
    %c0_4 = arith.constant 0 : index
    %2 = vector.load %arg2[%c0_2, %c0_3, %c0_4] : memref<2x8x128xf32, #tpu.memory_space<vmem>>, vector<2x8x128xf32>
    %3 = vector.shape_cast %2 : vector<2x8x128xf32> to vector<16x128xf32>
    %c0_5 = arith.constant 0 : index
    %c0_6 = arith.constant 0 : index
    %4 = vector.load %arg3[%c0_5, %c0_6] : memref<128x128xf32, #tpu.memory_space<vmem>>, vector<128x128xf32>
    %cst = arith.constant dense<0.000000e+00> : vector<16x128xf32>
    %5 = tpu.matmul %1, %4, %cst {dimension_numbers = #tpu.dot_dimension_numbers<[1], [0], [0], [1], [0, 0, 1, 1], [], []>} : vector<16x128xf32>, vector<128x128xf32>, vector<16x128xf32> -> vector<16x128xf32>
    %c0_7 = arith.constant 0 : index
    %c0_8 = arith.constant 0 : index
    %6 = vector.load %arg4[%c0_7, %c0_8] : memref<128x128xf32, #tpu.memory_space<vmem>>, vector<128x128xf32>
    %cst_9 = arith.constant dense<0.000000e+00> : vector<16x128xf32>
    %7 = tpu.matmul %3, %6, %cst_9 {dimension_numbers = #tpu.dot_dimension_numbers<[1], [0], [0], [1], [0, 0, 1, 1], [], []>} : vector<16x128xf32>, vector<128x128xf32>, vector<16x128xf32> -> vector<16x128xf32>
    %c0_10 = arith.constant 0 : index
    %c0_11 = arith.constant 0 : index
    %8 = vector.load %arg5[%c0_10, %c0_11] : memref<128x128xf32, #tpu.memory_space<vmem>>, vector<128x128xf32>
    %cst_12 = arith.constant dense<0.000000e+00> : vector<16x128xf32>
    %9 = tpu.matmul %3, %8, %cst_12 {dimension_numbers = #tpu.dot_dimension_numbers<[1], [0], [0], [1], [0, 0, 1, 1], [], []>} : vector<16x128xf32>, vector<128x128xf32>, vector<16x128xf32> -> vector<16x128xf32>
    %c0_13 = arith.constant 0 : index
    %c0_14 = arith.constant 0 : index
    %10 = vector.load %arg6[%c0_13, %c0_14] : memref<128x128xf32, #tpu.memory_space<vmem>>, vector<128x128xf32>
    %cst_15 = arith.constant 0.000000e+00 : f32
    %11 = vector.broadcast %cst_15 : f32 to vector<16x128xf32>
    %12 = vector.extract_strided_slice %5 {offsets = [0, 0], sizes = [16, 64], strides = [1, 1]} : vector<16x128xf32> to vector<16x64xf32>
    %13 = vector.shape_cast %12 : vector<16x64xf32> to vector<2x8x64xf32>
    %14 = vector.extract_strided_slice %7 {offsets = [0, 0], sizes = [16, 64], strides = [1, 1]} : vector<16x128xf32> to vector<16x64xf32>
    %15 = vector.shape_cast %14 : vector<16x64xf32> to vector<2x8x64xf32>
    %16 = vector.extract_strided_slice %9 {offsets = [0, 0], sizes = [16, 64], strides = [1, 1]} : vector<16x128xf32> to vector<16x64xf32>
    %17 = vector.shape_cast %16 : vector<16x64xf32> to vector<2x8x64xf32>
    "tpu.trace_start"() <{level = 10 : i32, message = "bqd,bkd->bqk"}> : () -> ()
    %cst_16 = arith.constant dense<0.000000e+00> : vector<2x8x8xf32>
    %18 = tpu.matmul %13, %15, %cst_16 {dimension_numbers = #tpu.dot_dimension_numbers<[2], [2], [1], [1], [0, 0, 0, 1, 1, 1], [0], [0]>} : vector<2x8x64xf32>, vector<2x8x64xf32>, vector<2x8x8xf32> -> vector<2x8x8xf32>
    "tpu.trace_stop"() : () -> ()
    %cst_17 = arith.constant dense<0xFF800000> : vector<2x8xf32>
    %19 = vector.multi_reduction <maximumf>, %18, %cst_17 [2] : vector<2x8x8xf32> to vector<2x8xf32>
    %20 = vector.shape_cast %19 : vector<2x8xf32> to vector<2x8x1xf32>
    %21 = vector.broadcast %20 : vector<2x8x1xf32> to vector<2x8x8xf32>
    %22 = arith.subf %18, %21 : vector<2x8x8xf32>
    %23 = math.exp %22 : vector<2x8x8xf32>
    %cst_18 = arith.constant dense<0.000000e+00> : vector<2x8xf32>
    %24 = vector.multi_reduction <add>, %23, %cst_18 [2] : vector<2x8x8xf32> to vector<2x8xf32>
    %25 = vector.shape_cast %24 : vector<2x8xf32> to vector<2x8x1xf32>
    %26 = tpu.reciprocal %25 : vector<2x8x1xf32> -> vector<2x8x1xf32>
    %27 = vector.broadcast %26 : vector<2x8x1xf32> to vector<2x8x8xf32>
    %28 = arith.mulf %23, %27 : vector<2x8x8xf32>
    "tpu.trace_start"() <{level = 10 : i32, message = "bqk,bkd->bqd"}> : () -> ()
    %cst_19 = arith.constant dense<0.000000e+00> : vector<2x8x64xf32>
    %29 = tpu.matmul %28, %17, %cst_19 {dimension_numbers = #tpu.dot_dimension_numbers<[2], [1], [1], [2], [0, 0, 0, 1, 1, 2], [0], [0]>} : vector<2x8x8xf32>, vector<2x8x64xf32>, vector<2x8x64xf32> -> vector<2x8x64xf32>
    "tpu.trace_stop"() : () -> ()
    %30 = vector.shape_cast %29 : vector<2x8x64xf32> to vector<16x64xf32>
    %31 = vector.extract_strided_slice %10 {offsets = [0, 0], sizes = [64, 128], strides = [1, 1]} : vector<128x128xf32> to vector<64x128xf32>
    %cst_20 = arith.constant dense<0.000000e+00> : vector<16x128xf32>
    %32 = tpu.matmul %30, %31, %cst_20 {dimension_numbers = #tpu.dot_dimension_numbers<[1], [0], [0], [1], [0, 0, 1, 1], [], []>} : vector<16x64xf32>, vector<64x128xf32>, vector<16x128xf32> -> vector<16x128xf32>
    %33 = arith.addf %11, %32 : vector<16x128xf32>
    %34 = vector.extract_strided_slice %5 {offsets = [0, 64], sizes = [16, 64], strides = [1, 1]} : vector<16x128xf32> to vector<16x64xf32>
    %35 = vector.shape_cast %34 : vector<16x64xf32> to vector<2x8x64xf32>
    %36 = vector.extract_strided_slice %7 {offsets = [0, 64], sizes = [16, 64], strides = [1, 1]} : vector<16x128xf32> to vector<16x64xf32>
    %37 = vector.shape_cast %36 : vector<16x64xf32> to vector<2x8x64xf32>
    %38 = vector.extract_strided_slice %9 {offsets = [0, 64], sizes = [16, 64], strides = [1, 1]} : vector<16x128xf32> to vector<16x64xf32>
    %39 = vector.shape_cast %38 : vector<16x64xf32> to vector<2x8x64xf32>
    "tpu.trace_start"() <{level = 10 : i32, message = "bqd,bkd->bqk"}> : () -> ()
    %cst_21 = arith.constant dense<0.000000e+00> : vector<2x8x8xf32>
    %40 = tpu.matmul %35, %37, %cst_21 {dimension_numbers = #tpu.dot_dimension_numbers<[2], [2], [1], [1], [0, 0, 0, 1, 1, 1], [0], [0]>} : vector<2x8x64xf32>, vector<2x8x64xf32>, vector<2x8x8xf32> -> vector<2x8x8xf32>
    "tpu.trace_stop"() : () -> ()
    %cst_22 = arith.constant dense<0xFF800000> : vector<2x8xf32>
    %41 = vector.multi_reduction <maximumf>, %40, %cst_22 [2] : vector<2x8x8xf32> to vector<2x8xf32>
    %42 = vector.shape_cast %41 : vector<2x8xf32> to vector<2x8x1xf32>
    %43 = vector.broadcast %42 : vector<2x8x1xf32> to vector<2x8x8xf32>
    %44 = arith.subf %40, %43 : vector<2x8x8xf32>
    %45 = math.exp %44 : vector<2x8x8xf32>
    %cst_23 = arith.constant dense<0.000000e+00> : vector<2x8xf32>
    %46 = vector.multi_reduction <add>, %45, %cst_23 [2] : vector<2x8x8xf32> to vector<2x8xf32>
    %47 = vector.shape_cast %46 : vector<2x8xf32> to vector<2x8x1xf32>
    %48 = tpu.reciprocal %47 : vector<2x8x1xf32> -> vector<2x8x1xf32>
    %49 = vector.broadcast %48 : vector<2x8x1xf32> to vector<2x8x8xf32>
    %50 = arith.mulf %45, %49 : vector<2x8x8xf32>
    "tpu.trace_start"() <{level = 10 : i32, message = "bqk,bkd->bqd"}> : () -> ()
    %cst_24 = arith.constant dense<0.000000e+00> : vector<2x8x64xf32>
    %51 = tpu.matmul %50, %39, %cst_24 {dimension_numbers = #tpu.dot_dimension_numbers<[2], [1], [1], [2], [0, 0, 0, 1, 1, 2], [0], [0]>} : vector<2x8x8xf32>, vector<2x8x64xf32>, vector<2x8x64xf32> -> vector<2x8x64xf32>
    "tpu.trace_stop"() : () -> ()
    %52 = vector.shape_cast %51 : vector<2x8x64xf32> to vector<16x64xf32>
    %53 = vector.extract_strided_slice %10 {offsets = [64, 0], sizes = [64, 128], strides = [1, 1]} : vector<128x128xf32> to vector<64x128xf32>
    %cst_25 = arith.constant dense<0.000000e+00> : vector<16x128xf32>
    %54 = tpu.matmul %52, %53, %cst_25 {dimension_numbers = #tpu.dot_dimension_numbers<[1], [0], [0], [1], [0, 0, 1, 1], [], []>} : vector<16x64xf32>, vector<64x128xf32>, vector<16x128xf32> -> vector<16x128xf32>
    %55 = arith.addf %33, %54 : vector<16x128xf32>
    %c0_26 = arith.constant 0 : index
    %c0_27 = arith.constant 0 : index
    %56 = vector.load %arg7[%c0_26, %c0_27] : memref<1x128xf32, #tpu.memory_space<vmem>>, vector<1x128xf32>
    %57 = vector.broadcast %56 : vector<1x128xf32> to vector<16x128xf32>
    %58 = arith.addf %55, %57 : vector<16x128xf32>
    %59 = vector.shape_cast %58 : vector<16x128xf32> to vector<2x8x128xf32>
    %c0_28 = arith.constant 0 : index
    %c0_29 = arith.constant 0 : index
    %c0_30 = arith.constant 0 : index
    %60 = vector.load %arg8[%c0_28, %c0_29, %c0_30] : memref<2x8x128xf32, #tpu.memory_space<vmem>>, vector<2x8x128xf32>
    tpu.vector_store %arg8[%c0_28, %c0_29, %c0_30], %59 {strides = array<i32>} : memref<2x8x128xf32, #tpu.memory_space<vmem>>, vector<2x8x128xf32>,
    return
  }
  func.func @transform_0(%arg0: i32) -> (i32, i32, i32) {
    %c0_i32 = arith.constant 0 : i32
    %c0_i32_0 = arith.constant 0 : i32
    %c0_i32_1 = arith.constant 0 : i32
    return %arg0, %c0_i32, %c0_i32_0 : i32, i32, i32
  }
  func.func @transform_1(%arg0: i32) -> (i32, i32, i32) {
    %c0_i32 = arith.constant 0 : i32
    %c0_i32_0 = arith.constant 0 : i32
    %c0_i32_1 = arith.constant 0 : i32
    return %arg0, %c0_i32, %c0_i32_0 : i32, i32, i32
  }
  func.func @transform_2(%arg0: i32) -> (i32, i32) {
    %c0_i32 = arith.constant 0 : i32
    %c0_i32_0 = arith.constant 0 : i32
    %c0_i32_1 = arith.constant 0 : i32
    return %c0_i32, %c0_i32_0 : i32, i32
  }
  func.func @transform_3(%arg0: i32) -> (i32, i32) {
    %c0_i32 = arith.constant 0 : i32
    %c0_i32_0 = arith.constant 0 : i32
    %c0_i32_1 = arith.constant 0 : i32
    return %c0_i32, %c0_i32_0 : i32, i32
  }
  func.func @transform_4(%arg0: i32) -> (i32, i32) {
    %c0_i32 = arith.constant 0 : i32
    %c0_i32_0 = arith.constant 0 : i32
    %c0_i32_1 = arith.constant 0 : i32
    return %c0_i32, %c0_i32_0 : i32, i32
  }
  func.func @transform_5(%arg0: i32) -> (i32, i32) {
    %c0_i32 = arith.constant 0 : i32
    %c0_i32_0 = arith.constant 0 : i32
    %c0_i32_1 = arith.constant 0 : i32
    return %c0_i32, %c0_i32_0 : i32, i32
  }
  func.func @transform_6(%arg0: i32) -> (i32, i32) {
    %c0_i32 = arith.constant 0 : i32
    %c0_i32_0 = arith.constant 0 : i32
    %c0_i32_1 = arith.constant 0 : i32
    return %c0_i32, %c0_i32_0 : i32, i32
  }
  func.func @transform_7(%arg0: i32) -> (i32, i32, i32) {
    %c0_i32 = arith.constant 0 : i32
    %c0_i32_0 = arith.constant 0 : i32
    %c0_i32_1 = arith.constant 0 : i32
    return %arg0, %c0_i32, %c0_i32_0 : i32, i32, i32
  }
}

</mosaic_0001>

<llo_original>
// kernel: tpu_custom_call.1
$region0: #{tpu_custom_call.1}
  #allocation0 [shape = 'u32[]', space=smem, size = 0x4, offset = 0x4, fixed_abs, tag = 'smem constant byte address 0x4 - core index']
  #allocation1 [shape = 'u32[72,128]{1,0:T(1,128)}', space=vmem, size = 0x9000, scoped, tag = 'internal scratch']
  %s0 = inlined_call_operand.hbm [shape: f32[2,8,128], index: 0, kind: input, shape index: {}]
  %s1 = inlined_call_operand.hbm [shape: f32[2,8,128], index: 1, kind: input, shape index: {}]
  %s2 = inlined_call_operand.hbm [shape: f32[128,128], index: 2, kind: input, shape index: {}]
  %s3 = inlined_call_operand.hbm [shape: f32[128,128], index: 3, kind: input, shape index: {}]
  %s4 = inlined_call_operand.hbm [shape: f32[128,128], index: 4, kind: input, shape index: {}]
  %s5 = inlined_call_operand.hbm [shape: f32[128,128], index: 5, kind: input, shape index: {}]
  %s6 = inlined_call_operand.vmem [shape: f32[1,128], index: 6, kind: input, shape index: {}]
  %s7 = inlined_call_operand.hbm [shape: f32[2,8,128], index: 7, kind: output, shape index: {}]
  %s8 = sld [smem:[#allocation0]]
  $region62: #{tpu_custom_call.1} parent=0
    _
  %s10 = ssub.s32 1, %s8
  %s11 = scalar_select 0, %s10, %s8
  $region1: #{tpu_custom_call.1} parent=0
    #allocation2 [shape = 'u8[8192]{0}', space=vmem, size = 0x2000, scoped, tag = 'input window, operand 0, single buffered']
    #allocation3 [shape = 's32[1]{0}', space=sflag, size = 0x4, scoped, tag = 'scoped memory for tpu_custom_call.1']
    #allocation4 [shape = 's32[1]{0}', space=sflag, size = 0x4, scoped, tag = 'scoped memory for tpu_custom_call.1']
    #allocation5 [shape = 'u8[8192]{0}', space=vmem, size = 0x2000, scoped, tag = 'input window, operand 1, single buffered']
    #allocation6 [shape = 's32[1]{0}', space=sflag, size = 0x4, scoped, tag = 'scoped memory for tpu_custom_call.1']
    #allocation7 [shape = 'u8[65536]{0}', space=vmem, size = 0x10000, scoped, tag = 'input window, operand 2, single buffered']
    #allocation8 [shape = 'u8[65536]{0}', space=vmem, size = 0x10000, scoped, tag = 'input window, operand 3, single buffered']
    #allocation9 [shape = 's32[1]{0}', space=sflag, size = 0x4, scoped, tag = 'scoped memory for tpu_custom_call.1']
    #allocation10 [shape = 'u8[65536]{0}', space=vmem, size = 0x10000, scoped, tag = 'input window, operand 4, single buffered']
    #allocation11 [shape = 'u8[65536]{0}', space=vmem, size = 0x10000, scoped, tag = 'input window, operand 5, single buffered']
    #allocation12 [shape = 's32[1]{0}', space=sflag, size = 0x4, scoped, tag = 'scoped memory for tpu_custom_call.1']
    #allocation13 [shape = 'u8[8192]{0}', space=vmem, size = 0x2000, scoped, tag = 'output window, operand 0, single buffered']
    %12 = vsyncpa [#allocation3], 0
    %13 = vsyncpa [#allocation6], 0
    %14 = vsyncpa [#allocation9], 0
    %15 = vsyncpa [#allocation12], 0
    %16 = vsyncpa [#allocation4], 0
    // Predicated region
    $region2: #{tpu_custom_call.1} parent=1 // pred_check
      _
    $region3: #{tpu_custom_call.1} parent=1 // pred_check_branch
      %18 = sbr.rel (0) target = $region5
    $region4: #{tpu_custom_call.1} parent=1 // pred_region
      %20 = vsyncadd [#allocation3], 0
      %s21 = sshll.u32 %s0, 4
      %s22 = int_to_ptr.hbm [resolvable:$true] %s21
      %s23 = sshll.u32 [#allocation2], 4
      %s24 = int_to_ptr.vmem [resolvable:$true] %s23
      %29 = dma.hbm_to_vmem [thread:$0]  %s22, 256, %s24, [#allocation3], 128, 128, 8
    $region5: #{tpu_custom_call.1} parent=1 // pred_fallthru
      _
    // Predicated region
    $region6: #{tpu_custom_call.1} parent=1 // pred_check
      _
    $region7: #{tpu_custom_call.1} parent=1 // pred_check_branch
      %31 = sbr.rel (0) target = $region9
    $region8: #{tpu_custom_call.1} parent=1 // pred_region
      %33 = vsyncadd [#allocation6], 0
      %s34 = sshll.u32 %s1, 4
      %s35 = int_to_ptr.hbm [resolvable:$true] %s34
      %s36 = sshll.u32 [#allocation5], 4
      %s37 = int_to_ptr.vmem [resolvable:$true] %s36
      %42 = dma.hbm_to_vmem [thread:$0]  %s35, 256, %s37, [#allocation6], 128, 128, 8
    $region9: #{tpu_custom_call.1} parent=1 // pred_fallthru
      _
    // Predicated region
    $region10: #{tpu_custom_call.1} parent=1 // pred_check
      _
    $region11: #{tpu_custom_call.1} parent=1 // pred_check_branch
      %44 = sbr.rel (0) target = $region13
    $region12: #{tpu_custom_call.1} parent=1 // pred_region
      %46 = vsyncadd [#allocation6], 0
      %s47 = sshll.u32 %s2, 4
      %s48 = int_to_ptr.hbm [resolvable:$true] %s47
      %s49 = sshll.u32 [#allocation7], 4
      %s50 = int_to_ptr.vmem [resolvable:$true] %s49
      %55 = dma.hbm_to_vmem [thread:$0]  %s48, 2048, %s50, [#allocation6], 128, 128, 8
    $region13: #{tpu_custom_call.1} parent=1 // pred_fallthru
      _
    // Predicated region
    $region14: #{tpu_custom_call.1} parent=1 // pred_check
      _
    $region15: #{tpu_custom_call.1} parent=1 // pred_check_branch
      %57 = sbr.rel (0) target = $region17
    $region16: #{tpu_custom_call.1} parent=1 // pred_region
      %59 = vsyncadd [#allocation9], 0
      %s60 = sshll.u32 %s3, 4
      %s61 = int_to_ptr.hbm [resolvable:$true] %s60
      %s62 = sshll.u32 [#allocation8], 4
      %s63 = int_to_ptr.vmem [resolvable:$true] %s62
      %68 = dma.hbm_to_vmem [thread:$0]  %s61, 2048, %s63, [#allocation9], 128, 128, 8
    $region17: #{tpu_custom_call.1} parent=1 // pred_fallthru
      _
    // Predicated region
    $region18: #{tpu_custom_call.1} parent=1 // pred_check
      _
    $region19: #{tpu_custom_call.1} parent=1 // pred_check_branch
      %70 = sbr.rel (0) target = $region21
    $region20: #{tpu_custom_call.1} parent=1 // pred_region
      %72 = vsyncadd [#allocation9], 0
      %s73 = sshll.u32 %s4, 4
      %s74 = int_to_ptr.hbm [resolvable:$true] %s73
      %s75 = sshll.u32 [#allocation10], 4
      %s76 = int_to_ptr.vmem [resolvable:$true] %s75
      %81 = dma.hbm_to_vmem [thread:$0]  %s74, 2048, %s76, [#allocation9], 128, 128, 8
    $region21: #{tpu_custom_call.1} parent=1 // pred_fallthru
      _
    // Predicated region
    $region22: #{tpu_custom_call.1} parent=1 // pred_check
      _
    $region23: #{tpu_custom_call.1} parent=1 // pred_check_branch
      %83 = sbr.rel (0) target = $region25
    $region24: #{tpu_custom_call.1} parent=1 // pred_region
      %85 = vsyncadd [#allocation12], 0
      %s86 = sshll.u32 %s5, 4
      %s87 = int_to_ptr.hbm [resolvable:$true] %s86
      %s88 = sshll.u32 [#allocation11], 4
      %s89 = int_to_ptr.vmem [resolvable:$true] %s88
      %94 = dma.hbm_to_vmem [thread:$0]  %s87, 2048, %s89, [#allocation12], 128, 128, 8
    $region25: #{tpu_custom_call.1} parent=1 // pred_fallthru
      _
    // Predicated region
    $region26: #{tpu_custom_call.1} parent=1 // pred_check
      _
    $region27: #{tpu_custom_call.1} parent=1 // pred_check_branch
      %96 = sbr.rel (0) target = $region29
    $region28: #{tpu_custom_call.1} parent=1 // pred_region
      _
    $region29: #{tpu_custom_call.1} parent=1 // pred_fallthru
      _
    // Predicated region
    $region30: #{tpu_custom_call.1} parent=1 // pred_check
      _
    $region31: #{tpu_custom_call.1} parent=1 // pred_check_branch
      %98 = sbr.rel (0) target = $region33
    $region32: #{tpu_custom_call.1} parent=1 // pred_region
      %100 = dma.done [#allocation3], 256
    $region33: #{tpu_custom_call.1} parent=1 // pred_fallthru
      _
    // Predicated region
    $region34: #{tpu_custom_call.1} parent=1 // pred_check
      _
    $region35: #{tpu_custom_call.1} parent=1 // pred_check_branch
      %102 = sbr.rel (0) target = $region37
    $region36: #{tpu_custom_call.1} parent=1 // pred_region
      %104 = dma.done [#allocation6], 256
    $region37: #{tpu_custom_call.1} parent=1 // pred_fallthru
      _
    // Predicated region
    $region38: #{tpu_custom_call.1} parent=1 // pred_check
      _
    $region39: #{tpu_custom_call.1} parent=1 // pred_check_branch
      %106 = sbr.rel (0) target = $region41
    $region40: #{tpu_custom_call.1} parent=1 // pred_region
      %108 = dma.done [#allocation6], 2048
    $region41: #{tpu_custom_call.1} parent=1 // pred_fallthru
      _
    // Predicated region
    $region42: #{tpu_custom_call.1} parent=1 // pred_check
      _
    $region43: #{tpu_custom_call.1} parent=1 // pred_check_branch
      %110 = sbr.rel (0) target = $region45
    $region44: #{tpu_custom_call.1} parent=1 // pred_region
      %112 = dma.done [#allocation9], 2048
    $region45: #{tpu_custom_call.1} parent=1 // pred_fallthru
      _
    // Predicated region
    $region46: #{tpu_custom_call.1} parent=1 // pred_check
      _
    $region47: #{tpu_custom_call.1} parent=1 // pred_check_branch
      %114 = sbr.rel (0) target = $region49
    $region48: #{tpu_custom_call.1} parent=1 // pred_region
      %116 = dma.done [#allocation9], 2048
    $region49: #{tpu_custom_call.1} parent=1 // pred_fallthru
      _
    // Predicated region
    $region50: #{tpu_custom_call.1} parent=1 // pred_check
      _
    $region51: #{tpu_custom_call.1} parent=1 // pred_check_branch
      %118 = sbr.rel (0) target = $region53
    $region52: #{tpu_custom_call.1} parent=1 // pred_region
      %120 = dma.done [#allocation12], 2048
    $region53: #{tpu_custom_call.1} parent=1 // pred_fallthru
      _
    %v121 = vld [vmem:[#allocation2] sm:$0xff]
    %v122 = vld [vmem:[#allocation2 + $0x8] sm:$0xff]
    %v123 = vld [vmem:[#allocation5] sm:$0xff]
    %v124 = vld [vmem:[#allocation5 + $0x8] sm:$0xff]
    %v125 = vld [vmem:[#allocation7] sm:$0xff]
    %v126 = vld [vmem:[#allocation7 + $0x8] sm:$0xff]
    %v127 = vld [vmem:[#allocation7 + $0x10] sm:$0xff]
    %v128 = vld [vmem:[#allocation7 + $0x18] sm:$0xff]
    %v129 = vld [vmem:[#allocation7 + $0x20] sm:$0xff]
    %v130 = vld [vmem:[#allocation7 + $0x28] sm:$0xff]
    %v131 = vld [vmem:[#allocation7 + $0x30] sm:$0xff]
    %v132 = vld [vmem:[#allocation7 + $0x38] sm:$0xff]
    %v133 = vld [vmem:[#allocation7 + $0x40] sm:$0xff]
    %v134 = vld [vmem:[#allocation7 + $0x48] sm:$0xff]
    %v135 = vld [vmem:[#allocation7 + $0x50] sm:$0xff]
    %v136 = vld [vmem:[#allocation7 + $0x58] sm:$0xff]
    %v137 = vld [vmem:[#allocation7 + $0x60] sm:$0xff]
    %v138 = vld [vmem:[#allocation7 + $0x68] sm:$0xff]
    %v139 = vld [vmem:[#allocation7 + $0x70] sm:$0xff]
    %v140 = vld [vmem:[#allocation7 + $0x78] sm:$0xff]
    %141 = vmatpush.msra.mxu0 %v140
    %142 = vmatpush.msra.mxu0 %v139
    %143 = vmatpush.msra.mxu0 %v138
    %144 = vmatpush.msra.mxu0 %v137
    %145 = vmatpush.msra.mxu0 %v136
    %146 = vmatpush.msra.mxu0 %v135
    %147 = vmatpush.msra.mxu0 %v134
    %148 = vmatpush.msra.mxu0 %v133
    %149 = vmatpush.msra.mxu0 %v132
    %150 = vmatpush.msra.mxu0 %v131
    %151 = vmatpush.msra.mxu0 %v130
    %152 = vmatpush.msra.mxu0 %v129
    %153 = vmatpush.msra.mxu0 %v128
    %154 = vmatpush.msra.mxu0 %v127
    %155 = vmatpush.msra.mxu0 %v126
    %156 = vmatpush.msra.mxu0 %v125
    %157 = vmatmul.f32.gmra.mxu0 %v121
    %v158 = vpop.f32.mrf.mxu0
    %v159 = vadd.f32 0.0, %v158
    %160 = vmatmul.f32.gmra.mxu0 %v122
    %v161 = vpop.f32.mrf.mxu0
    %v162 = vadd.f32 0.0, %v161
    %163 = vdwg.mxu0
    %v164 = vld [vmem:[#allocation8] sm:$0xff]
    %v165 = vld [vmem:[#allocation8 + $0x8] sm:$0xff]
    %v166 = vld [vmem:[#allocation8 + $0x10] sm:$0xff]
    %v167 = vld [vmem:[#allocation8 + $0x18] sm:$0xff]
    %v168 = vld [vmem:[#allocation8 + $0x20] sm:$0xff]
    %v169 = vld [vmem:[#allocation8 + $0x28] sm:$0xff]
    %v170 = vld [vmem:[#allocation8 + $0x30] sm:$0xff]
    %v171 = vld [vmem:[#allocation8 + $0x38] sm:$0xff]
    %v172 = vld [vmem:[#allocation8 + $0x40] sm:$0xff]
    %v173 = vld [vmem:[#allocation8 + $0x48] sm:$0xff]
    %v174 = vld [vmem:[#allocation8 + $0x50] sm:$0xff]
    %v175 = vld [vmem:[#allocation8 + $0x58] sm:$0xff]
    %v176 = vld [vmem:[#allocation8 + $0x60] sm:$0xff]
    %v177 = vld [vmem:[#allocation8 + $0x68] sm:$0xff]
    %v178 = vld [vmem:[#allocation8 + $0x70] sm:$0xff]
    %v179 = vld [vmem:[#allocation8 + $0x78] sm:$0xff]
    %180 = vmatpush.msra.mxu0 %v179
    %181 = vmatpush.msra.mxu0 %v178
    %182 = vmatpush.msra.mxu0 %v177
    %183 = vmatpush.msra.mxu0 %v176
    %184 = vmatpush.msra.mxu0 %v175
    %185 = vmatpush.msra.mxu0 %v174
    %186 = vmatpush.msra.mxu0 %v173
    %187 = vmatpush.msra.mxu0 %v172
    %188 = vmatpush.msra.mxu0 %v171
    %189 = vmatpush.msra.mxu0 %v170
    %190 = vmatpush.msra.mxu0 %v169
    %191 = vmatpush.msra.mxu0 %v168
    %192 = vmatpush.msra.mxu0 %v167
    %193 = vmatpush.msra.mxu0 %v166
    %194 = vmatpush.msra.mxu0 %v165
    %195 = vmatpush.msra.mxu0 %v164
    %196 = vmatmul.f32.gmra.mxu0 %v123
    %v197 = vpop.f32.mrf.mxu0
    %v198 = vadd.f32 0.0, %v197
    %199 = vmatmul.f32.gmra.mxu0 %v124
    %v200 = vpop.f32.mrf.mxu0
    %v201 = vadd.f32 0.0, %v200
    %202 = vdwg.mxu0
    %v203 = vld [vmem:[#allocation10] sm:$0xff]
    %v204 = vld [vmem:[#allocation10 + $0x8] sm:$0xff]
    %v205 = vld [vmem:[#allocation10 + $0x10] sm:$0xff]
    %v206 = vld [vmem:[#allocation10 + $0x18] sm:$0xff]
    %v207 = vld [vmem:[#allocation10 + $0x20] sm:$0xff]
    %v208 = vld [vmem:[#allocation10 + $0x28] sm:$0xff]
    %v209 = vld [vmem:[#allocation10 + $0x30] sm:$0xff]
    %v210 = vld [vmem:[#allocation10 + $0x38] sm:$0xff]
    %v211 = vld [vmem:[#allocation10 + $0x40] sm:$0xff]
    %v212 = vld [vmem:[#allocation10 + $0x48] sm:$0xff]
    %v213 = vld [vmem:[#allocation10 + $0x50] sm:$0xff]
    %v214 = vld [vmem:[#allocation10 + $0x58] sm:$0xff]
    %v215 = vld [vmem:[#allocation10 + $0x60] sm:$0xff]
    %v216 = vld [vmem:[#allocation10 + $0x68] sm:$0xff]
    %v217 = vld [vmem:[#allocation10 + $0x70] sm:$0xff]
    %v218 = vld [vmem:[#allocation10 + $0x78] sm:$0xff]
    %219 = vmatpush.msra.mxu0 %v218
    %220 = vmatpush.msra.mxu0 %v217
    %221 = vmatpush.msra.mxu0 %v216
    %222 = vmatpush.msra.mxu0 %v215
    %223 = vmatpush.msra.mxu0 %v214
    %224 = vmatpush.msra.mxu0 %v213
    %225 = vmatpush.msra.mxu0 %v212
    %226 = vmatpush.msra.mxu0 %v211
    %227 = vmatpush.msra.mxu0 %v210
    %228 = vmatpush.msra.mxu0 %v209
    %229 = vmatpush.msra.mxu0 %v208
    %230 = vmatpush.msra.mxu0 %v207
    %231 = vmatpush.msra.mxu0 %v206
    %232 = vmatpush.msra.mxu0 %v205
    %233 = vmatpush.msra.mxu0 %v204
    %234 = vmatpush.msra.mxu0 %v203
    %235 = vmatmul.f32.gmra.mxu0 %v123
    %v236 = vpop.f32.mrf.mxu0
    %v237 = vadd.f32 0.0, %v236
    %238 = vmatmul.f32.gmra.mxu0 %v124
    %v239 = vpop.f32.mrf.mxu0
    %v240 = vadd.f32 0.0, %v239
    %241 = vdwg.mxu0
    %v242 = vld [vmem:[#allocation11] sm:$0xff]
    %v243 = vld [vmem:[#allocation11 + $0x8] sm:$0xff]
    %v244 = vld [vmem:[#allocation11 + $0x10] sm:$0xff]
    %v245 = vld [vmem:[#allocation11 + $0x18] sm:$0xff]
    %v246 = vld [vmem:[#allocation11 + $0x20] sm:$0xff]
    %v247 = vld [vmem:[#allocation11 + $0x28] sm:$0xff]
    %v248 = vld [vmem:[#allocation11 + $0x30] sm:$0xff]
    %v249 = vld [vmem:[#allocation11 + $0x38] sm:$0xff]
    %v250 = vld [vmem:[#allocation11 + $0x40] sm:$0xff]
    %v251 = vld [vmem:[#allocation11 + $0x48] sm:$0xff]
    %v252 = vld [vmem:[#allocation11 + $0x50] sm:$0xff]
    %v253 = vld [vmem:[#allocation11 + $0x58] sm:$0xff]
    %v254 = vld [vmem:[#allocation11 + $0x60] sm:$0xff]
    %v255 = vld [vmem:[#allocation11 + $0x68] sm:$0xff]
    %v256 = vld [vmem:[#allocation11 + $0x70] sm:$0xff]
    %v257 = vld [vmem:[#allocation11 + $0x78] sm:$0xff]
    %vm258 = vcmask 523264
    %v260 = vsel %vm258, %v159, 0
    %v263 = vsel %vm258, %v198, 0
    %265 = vmatpush.xpose.msra.mxu0 0.0
    %266 = vmatpush.xpose.msra.mxu0 0.0
    %267 = vmatpush.xpose.msra.mxu0 0.0
    %268 = vmatpush.xpose.msra.mxu0 0.0
    %269 = vmatpush.xpose.msra.mxu0 0.0
    %270 = vmatpush.xpose.msra.mxu0 0.0
    %271 = vmatpush.xpose.msra.mxu0 0.0
    %272 = vmatpush.xpose.msra.mxu0 0.0
    %273 = vmatpush.xpose.msra.mxu0 0.0
    %274 = vmatpush.xpose.msra.mxu0 0.0
    %275 = vmatpush.xpose.msra.mxu0 0.0
    %276 = vmatpush.xpose.msra.mxu0 0.0
    %277 = vmatpush.xpose.msra.mxu0 0.0
    %278 = vmatpush.xpose.msra.mxu0 0.0
    %279 = vmatpush.xpose.msra.mxu0 0.0
    %280 = vmatpush.xpose.msra.mxu0 %v263
    %281 = vmatmul.f32.gmra.mxu0 %v260
    %v282 = vpop.f32.mrf.mxu0
    %v283 = vadd.f32 0.0, %v282
    %284 = vdwg.mxu0
    %v286 = vsel %vm258, %v162, 0
    %v289 = vsel %vm258, %v201, 0
    %291 = vmatpush.xpose.msra.mxu0 0.0
    %292 = vmatpush.xpose.msra.mxu0 0.0
    %293 = vmatpush.xpose.msra.mxu0 0.0
    %294 = vmatpush.xpose.msra.mxu0 0.0
    %295 = vmatpush.xpose.msra.mxu0 0.0
    %296 = vmatpush.xpose.msra.mxu0 0.0
    %297 = vmatpush.xpose.msra.mxu0 0.0
    %298 = vmatpush.xpose.msra.mxu0 0.0
    %299 = vmatpush.xpose.msra.mxu0 0.0
    %300 = vmatpush.xpose.msra.mxu0 0.0
    %301 = vmatpush.xpose.msra.mxu0 0.0
    %302 = vmatpush.xpose.msra.mxu0 0.0
    %303 = vmatpush.xpose.msra.mxu0 0.0
    %304 = vmatpush.xpose.msra.mxu0 0.0
    %305 = vmatpush.xpose.msra.mxu0 0.0
    %306 = vmatpush.xpose.msra.mxu0 %v289
    %307 = vmatmul.f32.gmra.mxu0 %v286
    %v308 = vpop.f32.mrf.mxu0
    %v309 = vadd.f32 0.0, %v308
    %310 = vdwg.mxu0
    %vm311 = vcmask 64512
    %v312 = vsel %vm311, %v283, -inf
    %313 = vmax.xlane.f32.xlu0 %v312
    %v314 = vpop.xlane.xlu0 %313
    %v315 = vsel %vm311, %v309, -inf
    %316 = vmax.xlane.f32.xlu0 %v315
    %v317 = vpop.xlane.xlu0 %316
    %v318 = vsub.f32 %v283, %v314
    %v319 = vsub.f32 %v309, %v317
    %v320 = vmul.f32 %v318, 1.442695
    %v321 = vpow.pop %v320
    %v322 = vmul.f32 %v319, 1.442695
    %v323 = vpow.pop %v322
    %v324 = vsel %vm311, %v321, 0.0
    %325 = vadd.xlane.f32.xlu0 %v324
    %v326 = vpop.xlane.xlu0 %325
    %v327 = vsel %vm311, %v323, 0.0
    %328 = vadd.xlane.f32.xlu0 %v327
    %v329 = vpop.xlane.xlu0 %328
    %v330 = vrcp.pop %v326
    %v331 = vmul.f32 %v326, %v330
    %v332 = vsub.f32 1.0, %v331
    %v333 = vmul.f32 %v330, %v332
    %v334 = vadd.f32 %v330, %v333
    %vm335 = vweird.f32 %v326
    %vm336 = vweird.f32 %v330
    %vm337 = vmor %vm335, %vm336
    %v338 = vsel %vm337, %v330, %v334
    %v339 = vand.u32 2147483647, %v326
    %vm340 = vcmp.eq.f32.partialorder %v339, 8.507059e+37
    %v341 = vand.u32 %v326, 2147483648
    %v342 = vor.u32 1.1754944e-38, %v341
    %v343 = vsel %vm340, %v342, %v338
    %v344 = vrcp.pop %v329
    %v345 = vmul.f32 %v329, %v344
    %v346 = vsub.f32 1.0, %v345
    %v347 = vmul.f32 %v344, %v346
    %v348 = vadd.f32 %v344, %v347
    %vm349 = vweird.f32 %v329
    %vm350 = vweird.f32 %v344
    %vm351 = vmor %vm349, %vm350
    %v352 = vsel %vm351, %v344, %v348
    %v353 = vand.u32 2147483647, %v329
    %vm354 = vcmp.eq.f32.partialorder %v353, 8.507059e+37
    %v355 = vand.u32 %v329, 2147483648
    %v356 = vor.u32 1.1754944e-38, %v355
    %v357 = vsel %vm354, %v356, %v352
    %v358 = vmul.f32 %v321, %v343
    %v359 = vmul.f32 %v323, %v357
    %v361 = vsel %vm311, %v358, 0
    %363 = vmatpush.msra.mxu0 0.0
    %364 = vmatpush.msra.mxu0 0.0
    %365 = vmatpush.msra.mxu0 0.0
    %366 = vmatpush.msra.mxu0 0.0
    %367 = vmatpush.msra.mxu0 0.0
    %368 = vmatpush.msra.mxu0 0.0
    %369 = vmatpush.msra.mxu0 0.0
    %370 = vmatpush.msra.mxu0 0.0
    %371 = vmatpush.msra.mxu0 0.0
    %372 = vmatpush.msra.mxu0 0.0
    %373 = vmatpush.msra.mxu0 0.0
    %374 = vmatpush.msra.mxu0 0.0
    %375 = vmatpush.msra.mxu0 0.0
    %376 = vmatpush.msra.mxu0 0.0
    %377 = vmatpush.msra.mxu0 0.0
    %378 = vmatpush.msra.mxu0 %v237
    %379 = vmatmul.f32.gmra.mxu0 %v361
    %v380 = vpop.f32.mrf.mxu0
    %v381 = vadd.f32 0.0, %v380
    %382 = vdwg.mxu0
    %v384 = vsel %vm311, %v359, 0
    %386 = vmatpush.msra.mxu0 0.0
    %387 = vmatpush.msra.mxu0 0.0
    %388 = vmatpush.msra.mxu0 0.0
    %389 = vmatpush.msra.mxu0 0.0
    %390 = vmatpush.msra.mxu0 0.0
    %391 = vmatpush.msra.mxu0 0.0
    %392 = vmatpush.msra.mxu0 0.0
    %393 = vmatpush.msra.mxu0 0.0
    %394 = vmatpush.msra.mxu0 0.0
    %395 = vmatpush.msra.mxu0 0.0
    %396 = vmatpush.msra.mxu0 0.0
    %397 = vmatpush.msra.mxu0 0.0
    %398 = vmatpush.msra.mxu0 0.0
    %399 = vmatpush.msra.mxu0 0.0
    %400 = vmatpush.msra.mxu0 0.0
    %401 = vmatpush.msra.mxu0 %v240
    %402 = vmatmul.f32.gmra.mxu0 %v384
    %v403 = vpop.f32.mrf.mxu0
    %v404 = vadd.f32 0.0, %v403
    %405 = vdwg.mxu0
    %406 = vrot.lane.b32.xlu0 %v159, 64
    %v407 = vpop.permute.xlu0 %406
    %408 = vrot.lane.b32.xlu0 %v198, 64
    %v409 = vpop.permute.xlu0 %408
    %v410 = vsel %vm258, %v407, 0
    %v412 = vsel %vm258, %v409, 0
    %414 = vmatpush.xpose.msra.mxu0 0.0
    %415 = vmatpush.xpose.msra.mxu0 0.0
    %416 = vmatpush.xpose.msra.mxu0 0.0
    %417 = vmatpush.xpose.msra.mxu0 0.0
    %418 = vmatpush.xpose.msra.mxu0 0.0
    %419 = vmatpush.xpose.msra.mxu0 0.0
    %420 = vmatpush.xpose.msra.mxu0 0.0
    %421 = vmatpush.xpose.msra.mxu0 0.0
    %422 = vmatpush.xpose.msra.mxu0 0.0
    %423 = vmatpush.xpose.msra.mxu0 0.0
    %424 = vmatpush.xpose.msra.mxu0 0.0
    %425 = vmatpush.xpose.msra.mxu0 0.0
    %426 = vmatpush.xpose.msra.mxu0 0.0
    %427 = vmatpush.xpose.msra.mxu0 0.0
    %428 = vmatpush.xpose.msra.mxu0 0.0
    %429 = vmatpush.xpose.msra.mxu0 %v412
    %430 = vmatmul.f32.gmra.mxu0 %v410
    %v431 = vpop.f32.mrf.mxu0
    %v432 = vadd.f32 0.0, %v431
    %433 = vdwg.mxu0
    %434 = vrot.lane.b32.xlu0 %v162, 64
    %v435 = vpop.permute.xlu0 %434
    %436 = vrot.lane.b32.xlu0 %v201, 64
    %v437 = vpop.permute.xlu0 %436
    %v438 = vsel %vm258, %v435, 0
    %v440 = vsel %vm258, %v437, 0
    %442 = vmatpush.xpose.msra.mxu0 0.0
    %443 = vmatpush.xpose.msra.mxu0 0.0
    %444 = vmatpush.xpose.msra.mxu0 0.0
    %445 = vmatpush.xpose.msra.mxu0 0.0
    %446 = vmatpush.xpose.msra.mxu0 0.0
    %447 = vmatpush.xpose.msra.mxu0 0.0
    %448 = vmatpush.xpose.msra.mxu0 0.0
    %449 = vmatpush.xpose.msra.mxu0 0.0
    %450 = vmatpush.xpose.msra.mxu0 0.0
    %451 = vmatpush.xpose.msra.mxu0 0.0
    %452 = vmatpush.xpose.msra.mxu0 0.0
    %453 = vmatpush.xpose.msra.mxu0 0.0
    %454 = vmatpush.xpose.msra.mxu0 0.0
    %455 = vmatpush.xpose.msra.mxu0 0.0
    %456 = vmatpush.xpose.msra.mxu0 0.0
    %457 = vmatpush.xpose.msra.mxu0 %v440
    %458 = vmatmul.f32.gmra.mxu0 %v438
    %v459 = vpop.f32.mrf.mxu0
    %v460 = vadd.f32 0.0, %v459
    %461 = vdwg.mxu0
    %v462 = vsel %vm311, %v432, -inf
    %463 = vmax.xlane.f32.xlu0 %v462
    %v464 = vpop.xlane.xlu0 %463
    %v465 = vsel %vm311, %v460, -inf
    %466 = vmax.xlane.f32.xlu0 %v465
    %v467 = vpop.xlane.xlu0 %466
    %v468 = vsub.f32 %v432, %v464
    %v469 = vsub.f32 %v460, %v467
    %v470 = vmul.f32 %v468, 1.442695
    %v471 = vpow.pop %v470
    %v472 = vmul.f32 %v469, 1.442695
    %v473 = vpow.pop %v472
    %v474 = vsel %vm311, %v471, 0.0
    %475 = vadd.xlane.f32.xlu0 %v474
    %v476 = vpop.xlane.xlu0 %475
    %v477 = vsel %vm311, %v473, 0.0
    %478 = vadd.xlane.f32.xlu0 %v477
    %v479 = vpop.xlane.xlu0 %478
    %v480 = vrcp.pop %v476
    %v481 = vmul.f32 %v476, %v480
    %v482 = vsub.f32 1.0, %v481
    %v483 = vmul.f32 %v480, %v482
    %v484 = vadd.f32 %v480, %v483
    %vm485 = vweird.f32 %v476
    %vm486 = vweird.f32 %v480
    %vm487 = vmor %vm485, %vm486
    %v488 = vsel %vm487, %v480, %v484
    %v489 = vand.u32 2147483647, %v476
    %vm490 = vcmp.eq.f32.partialorder %v489, 8.507059e+37
    %v491 = vand.u32 %v476, 2147483648
    %v492 = vor.u32 1.1754944e-38, %v491
    %v493 = vsel %vm490, %v492, %v488
    %v494 = vrcp.pop %v479
    %v495 = vmul.f32 %v479, %v494
    %v496 = vsub.f32 1.0, %v495
    %v497 = vmul.f32 %v494, %v496
    %v498 = vadd.f32 %v494, %v497
    %vm499 = vweird.f32 %v479
    %vm500 = vweird.f32 %v494
    %vm501 = vmor %vm499, %vm500
    %v502 = vsel %vm501, %v494, %v498
    %v503 = vand.u32 2147483647, %v479
    %vm504 = vcmp.eq.f32.partialorder %v503, 8.507059e+37
    %v505 = vand.u32 %v479, 2147483648
    %v506 = vor.u32 1.1754944e-38, %v505
    %v507 = vsel %vm504, %v506, %v502
    %v508 = vmul.f32 %v471, %v493
    %v509 = vmul.f32 %v473, %v507
    %511 = vrot.lane.b32.xlu0 %v237, 64
    %v512 = vpop.permute.xlu0 %511
    %v515 = vsel %vm311, %v508, 0
    %517 = vmatpush.msra.mxu0 0.0
    %518 = vmatpush.msra.mxu0 0.0
    %519 = vmatpush.msra.mxu0 0.0
    %520 = vmatpush.msra.mxu0 0.0
    %521 = vmatpush.msra.mxu0 0.0
    %522 = vmatpush.msra.mxu0 0.0
    %523 = vmatpush.msra.mxu0 0.0
    %524 = vmatpush.msra.mxu0 0.0
    %525 = vmatpush.msra.mxu0 0.0
    %526 = vmatpush.msra.mxu0 0.0
    %527 = vmatpush.msra.mxu0 0.0
    %528 = vmatpush.msra.mxu0 0.0
    %529 = vmatpush.msra.mxu0 0.0
    %530 = vmatpush.msra.mxu0 0.0
    %531 = vmatpush.msra.mxu0 0.0
    %532 = vmatpush.msra.mxu0 %v512
    %533 = vmatmul.f32.gmra.mxu0 %v515
    %v534 = vpop.f32.mrf.mxu0
    %v535 = vadd.f32 0.0, %v534
    %536 = vdwg.mxu0
    %538 = vrot.lane.b32.xlu0 %v240, 64
    %v539 = vpop.permute.xlu0 %538
    %v542 = vsel %vm311, %v509, 0
    %544 = vmatpush.msra.mxu0 0.0
    %545 = vmatpush.msra.mxu0 0.0
    %546 = vmatpush.msra.mxu0 0.0
    %547 = vmatpush.msra.mxu0 0.0
    %548 = vmatpush.msra.mxu0 0.0
    %549 = vmatpush.msra.mxu0 0.0
    %550 = vmatpush.msra.mxu0 0.0
    %551 = vmatpush.msra.mxu0 0.0
    %552 = vmatpush.msra.mxu0 0.0
    %553 = vmatpush.msra.mxu0 0.0
    %554 = vmatpush.msra.mxu0 0.0
    %555 = vmatpush.msra.mxu0 0.0
    %556 = vmatpush.msra.mxu0 0.0
    %557 = vmatpush.msra.mxu0 0.0
    %558 = vmatpush.msra.mxu0 0.0
    %559 = vmatpush.msra.mxu0 %v539
    %560 = vmatmul.f32.gmra.mxu0 %v542
    %v561 = vpop.f32.mrf.mxu0
    %v562 = vadd.f32 0.0, %v561
    %563 = vdwg.mxu0
    %v565 = vsel %vm258, %v535, 0
    %v568 = vsel %vm258, %v562, 0
    %570 = vmatpush.msra.mxu0 0.0
    %571 = vmatpush.msra.mxu0 0.0
    %572 = vmatpush.msra.mxu0 0.0
    %573 = vmatpush.msra.mxu0 0.0
    %574 = vmatpush.msra.mxu0 0.0
    %575 = vmatpush.msra.mxu0 0.0
    %576 = vmatpush.msra.mxu0 0.0
    %577 = vmatpush.msra.mxu0 0.0
    %578 = vmatpush.msra.mxu0 %v257
    %579 = vmatpush.msra.mxu0 %v256
    %580 = vmatpush.msra.mxu0 %v255
    %581 = vmatpush.msra.mxu0 %v254
    %582 = vmatpush.msra.mxu0 %v253
    %583 = vmatpush.msra.mxu0 %v252
    %584 = vmatpush.msra.mxu0 %v251
    %585 = vmatpush.msra.mxu0 %v250
    %586 = vmatmul.f32.gmra.mxu0 %v565
    %v587 = vpop.f32.mrf.mxu0
    %v588 = vadd.f32 0.0, %v587
    %589 = vmatmul.f32.gmra.mxu0 %v568
    %v590 = vpop.f32.mrf.mxu0
    %v591 = vadd.f32 0.0, %v590
    %592 = vdwg.mxu0
    %v594 = vsel %vm258, %v381, 0
    %v597 = vsel %vm258, %v404, 0
    %599 = vmatpush.msra.mxu0 0.0
    %600 = vmatpush.msra.mxu0 0.0
    %601 = vmatpush.msra.mxu0 0.0
    %602 = vmatpush.msra.mxu0 0.0
    %603 = vmatpush.msra.mxu0 0.0
    %604 = vmatpush.msra.mxu0 0.0
    %605 = vmatpush.msra.mxu0 0.0
    %606 = vmatpush.msra.mxu0 0.0
    %607 = vmatpush.msra.mxu0 %v249
    %608 = vmatpush.msra.mxu0 %v248
    %609 = vmatpush.msra.mxu0 %v247
    %610 = vmatpush.msra.mxu0 %v246
    %611 = vmatpush.msra.mxu0 %v245
    %612 = vmatpush.msra.mxu0 %v244
    %613 = vmatpush.msra.mxu0 %v243
    %614 = vmatpush.msra.mxu0 %v242
    %615 = vmatmul.f32.gmra.mxu0 %v594
    %v616 = vpop.f32.mrf.mxu0
    %v617 = vadd.f32 %v588, %v616
    %618 = vmatmul.f32.gmra.mxu0 %v597
    %v619 = vpop.f32.mrf.mxu0
    %v620 = vadd.f32 %v591, %v619
    %621 = vdwg.mxu0
    %v622 = vld [vmem:[%s6] sm:$0x1]
    %v624 = vperm.slane %v622, 0
    %v626 = vadd.f32 %v617, %v624
    %v627 = vadd.f32 %v620, %v624
    %628 = vst [vmem:[#allocation13] sm:$0xff] %v626
    %629 = vst [vmem:[#allocation13 + $0x8] sm:$0xff] %v627
    // Predicated region
    $region54: #{tpu_custom_call.1} parent=1 // pred_check
      _
    $region55: #{tpu_custom_call.1} parent=1 // pred_check_branch
      %631 = sbr.rel (0) target = $region57
    $region56: #{tpu_custom_call.1} parent=1 // pred_region
      %633 = vsyncadd [#allocation4], 0
      %s634 = sshll.u32 [#allocation13], 4
      %s635 = int_to_ptr.vmem [resolvable:$true] %s634
      %s636 = sshll.u32 %s7, 4
      %s637 = int_to_ptr.hbm [resolvable:$true] %s636
      %642 = dma.vmem_to_hbm [thread:$0]  %s635, 256, %s637, [#allocation4], 128, 128, 8
    $region57: #{tpu_custom_call.1} parent=1 // pred_fallthru
      _
    // Predicated region
    $region58: #{tpu_custom_call.1} parent=1 // pred_check
      _
    $region59: #{tpu_custom_call.1} parent=1 // pred_check_branch
      %644 = sbr.rel (0) target = $region61
    $region60: #{tpu_custom_call.1} parent=1 // pred_region
      %646 = dma.done [#allocation4], 256
    $region61: #{tpu_custom_call.1} parent=1 // pred_fallthru
      _
    %647 = vsyncpa [#allocation3], 1
    %648 = vsyncpa [#allocation6], 1
    %649 = vsyncpa [#allocation9], 1
    %650 = vsyncpa [#allocation12], 1
    %651 = vsyncpa [#allocation4], 1

</llo_original>
